<compile_context>
chip_gen: v7x
topology: tpu7x:2x2x1
jax: 0.10.0
libtpu: 0.0.40
codegen_flags: <defaults>
</compile_context>

<pallas_src>
import functools

import jax
import jax.numpy as jnp
from jax.experimental import pallas as pl
from jax.experimental.pallas import tpu as pltpu


def _round_up(x, m):
    return (x + m - 1) // m * m


def _cdiv(a, b):
    return -(-a // b)


def init_lstm_kernel(ann_ref, wf_ref, bf_ref, wi_ref, bi_ref, out_ref, acc_ref,
                     *, inv_hw):
    # ann_ref : (TB, TC, HW)  annotations chunk (NCHW flattened; HW on lanes)
    # wf_ref  : (TC, E)       factorize weight, pre-transposed (in, out)
    # bf_ref  : (1, E)
    # wi_ref  : (E, O)        init weight, pre-transposed (in, out)
    # bi_ref  : (1, O)
    # out_ref : (TB, O)
    # acc_ref : (TB, E) f32   partial (mean @ Wf) accumulator over channel chunks
    c = pl.program_id(1)

    @pl.when(c == 0)
    def _():
        acc_ref[...] = jnp.zeros_like(acc_ref)

    # Spatial mean for this channel chunk; dropout = identity (eval mode).
    mean_c = jnp.sum(ann_ref[...].astype(jnp.float32), axis=-1) * inv_hw   # (TB, TC)

    # Partial first Linear, accumulated over channel chunks.
    acc_ref[...] += jnp.dot(mean_c, wf_ref[...],
                            preferred_element_type=jnp.float32)

    @pl.when(c == pl.num_programs(1) - 1)
    def _():
        fac = acc_ref[...] + bf_ref[...]
        out = jnp.dot(fac, wi_ref[...],
                      preferred_element_type=jnp.float32) + bi_ref[...]
        out_ref[...] = out.astype(out_ref.dtype)


def _default_vmem_budget():
    phys = 128 * 1024 * 1024
    try:
        phys = int(pltpu.get_tpu_info().vmem_capacity_bytes)
    except Exception:
        pass
    # ~3/4 of physical, capped: ~96 MiB on v5e/v6e (128 MiB), ~48 MiB on v7x (64 MiB).
    return min((phys * 3) // 4, 96 * 1024 * 1024)


def _vmem_need(TB, TC, HW, E, O, ann_itemsize):
    ann = 2 * TB * TC * HW * ann_itemsize                       # double-buffered input
    wf = 2 * TC * E * 4
    wi = 2 * E * O * 4
    bias = 2 * (8 * _round_up(E, 128) + 8 * _round_up(O, 128)) * 4
    out = 2 * max(TB, 8) * _round_up(O, 128) * 4
    acc = max(TB, 8) * _round_up(E, 128) * 4
    return ann + wf + wi + bias + out + acc


def _choose_tiles(B, C, HW, E, O, ann_itemsize, budget):
    """Pick (TB, TC): blocks as large as the (0.8 * budget) byte limit allows,
    >=2 batch tiles when B > 8 (megacore), TC an exact divisor of C so the
    channel-chunk accumulation never touches padded garbage."""
    usable = int(budget * 0.8)

    # Full C first (single reduction step), then divisors of C that are
    # multiples of 8 (layout rule), descending.
    cands = [C] + sorted((d for d in range(8, C, 8) if C % d == 0), reverse=True)

    def tb_max(tc):
        fixed = (2 * tc * E * 4 + 2 * E * O * 4
                 + 2 * (8 * _round_up(E, 128) + 8 * _round_up(O, 128)) * 4)
        per_tb = (2 * tc * HW * ann_itemsize
                  + 2 * _round_up(O, 128) * 4 + _round_up(E, 128) * 4)
        return (usable - fixed) // per_tb

    TC, tbm = cands[-1], 1
    for tc in cands:
        m = tb_max(tc)
        if m >= min(B, 8):
            TC, tbm = tc, m
            break
    else:
        TC = cands[-1]
        tbm = max(tb_max(TC), 1)

    if B <= 8:
        TB = B                                     # full-extent batch block
    else:
        cap = max(int(min(tbm, 256)), 8)
        n_tiles = max(2, _cdiv(B, cap))            # >=2 tiles -> both v7x cores busy
        TB = min(_round_up(_cdiv(B, n_tiles), 8), _round_up(B, 8))
    return TB, TC


def init_lstm_forward(annotations, w_fac, b_fac, w_init, b_init,
                      decoder_dim, decoder_layers, *,
                      block_b=None, block_c=None, vmem_budget=None):
    """annotations: (B, C, H, W) NCHW.  Weights in torch (out, in) layout."""
    B, C, H, W = annotations.shape
    HW = H * W
    E = w_fac.shape[0]                     # embed_dim
    O = w_init.shape[0]                    # 2 * decoder_dim * decoder_layers
    assert O == 2 * decoder_dim * decoder_layers

    budget = _default_vmem_budget() if vmem_budget is None else vmem_budget
    itemsize = jnp.dtype(annotations.dtype).itemsize
    TB, TC = _choose_tiles(B, C, HW, E, O, itemsize, budget)
    if block_b is not None:
        TB = B if block_b >= B else _round_up(block_b, 8)
    if block_c is not None:
        assert C % block_c == 0 and (block_c % 8 == 0 or block_c == C)
        TC = block_c

    # NCHW -> (B, C, HW): free, contiguous reshape; no transpose/pad HBM pass.
    ann = annotations.reshape(B, C, HW)

    # One-time small weight transposes so the kernel runs k-major matmuls.
    wf_t = jnp.transpose(w_fac)            # (C, E)
    wi_t = jnp.transpose(w_init)           # (E, O)
    bf = b_fac.reshape(1, E)
    bi = b_init.reshape(1, O)

    grid = (_cdiv(B, TB), C // TC)
    vmem_limit = int(min(max(budget,
                             _vmem_need(TB, TC, HW, E, O, itemsize)
                             + 4 * 1024 * 1024),
                         128 * 1024 * 1024))

    out = pl.pallas_call(
        functools.partial(init_lstm_kernel, inv_hw=1.0 / float(HW)),
        out_shape=jax.ShapeDtypeStruct((B, O), jnp.float32),
        grid_spec=pltpu.PrefetchScalarGridSpec(
            num_scalar_prefetch=0,
            grid=grid,
            in_specs=[
                pl.BlockSpec((TB, TC, HW), lambda b, c: (b, c, 0)),   # annotations
                pl.BlockSpec((TC, E), lambda b, c: (c, 0)),           # factorize W^T
                pl.BlockSpec((1, E), lambda b, c: (0, 0)),            # factorize bias
                pl.BlockSpec((E, O), lambda b, c: (0, 0)),            # init W^T
                pl.BlockSpec((1, O), lambda b, c: (0, 0)),            # init bias
            ],
            out_specs=pl.BlockSpec((TB, O), lambda b, c: (b, 0)),
            scratch_shapes=[pltpu.VMEM((TB, E), jnp.float32)],
        ),
        compiler_params=pltpu.CompilerParams(
            dimension_semantics=("parallel", "arbitrary"),
            vmem_limit_bytes=vmem_limit,
        ),
    )(ann, wf_t, bf, wi_t, bi)

    # Same raw row-major reshape as torch's .reshape(2*L, B, D)
    init = out.reshape(2 * decoder_layers, B, decoder_dim)
    return init[:decoder_layers], init[decoder_layers:]


if __name__ == "__main__":
    # Small, deterministic hyperparameters consistent with the module.
    encoder_dim = 32          # C
    embed_dim = 64            # E
    decoder_dim = 32
    decoder_layers = 2
    H, W = 8, 8
    out_dim = 2 * decoder_dim * decoder_layers    # 128 (lane-dense output)

    key = jax.random.PRNGKey(0)
    k_ann, k_wf, k_bf, k_wi, k_bi, k_ann2 = jax.random.split(key, 6)

    # nn.Linear(encoder_dim, embed_dim): weight (embed_dim, encoder_dim)
    w_fac = jax.random.normal(k_wf, (embed_dim, encoder_dim), jnp.float32) * 0.05
    b_fac = jax.random.normal(k_bf, (embed_dim,), jnp.float32) * 0.05
    # nn.Linear(embed_dim, 2*decoder_dim*decoder_layers)
    w_init = jax.random.normal(k_wi, (out_dim, embed_dim), jnp.float32) * 0.05
    b_init = jax.random.normal(k_bi, (out_dim,), jnp.float32) * 0.05

    def reference(ann_f32):
        mean = ann_f32.mean(axis=(2, 3))
        out = (mean @ w_fac.T + b_fac) @ w_init.T + b_init
        r = out.reshape(2 * decoder_layers, ann_f32.shape[0], decoder_dim)
        return r[:decoder_layers], r[decoder_layers:]

    # Case 1: tiny batch, forced channel chunking (exercises the accumulator
    # path over the "arbitrary" reduction grid axis).
    B = 2
    ann = jax.random.normal(k_ann, (B, encoder_dim, H, W), jnp.float32)
    init_h, init_c = init_lstm_forward(ann, w_fac, b_fac, w_init, b_init,
                                       decoder_dim, decoder_layers, block_c=8)
    jax.block_until_ready((init_h, init_c))
    ref_h, ref_c = reference(ann)
    assert init_h.shape == (decoder_layers, B, decoder_dim)
    assert init_c.shape == (decoder_layers, B, decoder_dim)
    assert jnp.allclose(init_h, ref_h, atol=1e-5, rtol=1e-5)
    assert jnp.allclose(init_c, ref_c, atol=1e-5, rtol=1e-5)

    # Case 2: auto-tiled path; batch not a multiple of the batch tile
    # (exercises ragged-tail masking + multi-tile batch axis), bf16 input
    # (exercises the narrow-dtype path; accumulation stays f32 in-kernel).
    B2 = 10
    ann2 = jax.random.normal(k_ann2, (B2, encoder_dim, H, W), jnp.float32)
    ann2_bf16 = ann2.astype(jnp.bfloat16)
    init_h2, init_c2 = init_lstm_forward(ann2_bf16, w_fac, b_fac,
                                         w_init, b_init,
                                         decoder_dim, decoder_layers)
    jax.block_until_ready((init_h2, init_c2))
    ref_h2, ref_c2 = reference(ann2_bf16.astype(jnp.float32))
    assert init_h2.shape == (decoder_layers, B2, decoder_dim)
    assert jnp.allclose(init_h2, ref_h2, atol=1e-4, rtol=1e-4)
    assert jnp.allclose(init_c2, ref_c2, atol=1e-4, rtol=1e-4)

    print("KERNEL_OK")
</pallas_src>

<mosaic_0001>
module attributes {stable_mosaic.version = 11 : i64} {
  func.func @init_lstm_kernel(%arg0: i32, %arg1: i32, %arg2: memref<2x8x64xf32, #tpu.memory_space<vmem>>, %arg3: memref<8x64xf32, #tpu.memory_space<vmem>>, %arg4: memref<1x64xf32, #tpu.memory_space<vmem>>, %arg5: memref<64x128xf32, #tpu.memory_space<vmem>>, %arg6: memref<1x128xf32, #tpu.memory_space<vmem>>, %arg7: memref<2x128xf32, #tpu.memory_space<vmem>>, %arg8: memref<2x64xf32, #tpu.memory_space<vmem>>) attributes {dimension_semantics = [#tpu.dimension_semantics<parallel>, #tpu.dimension_semantics<arbitrary>], iteration_bounds = array<i64: 1, 4>, scalar_prefetch = 0 : i64, scratch_operands = 1 : i64, tpu.core_type = #tpu.core_type<tc>, window_params = [{transform_indices = @transform_0, window_bounds = array<i64: 2, 8, 64>}, {transform_indices = @transform_1, window_bounds = array<i64: 8, 64>}, {pipeline_mode = #tpu.pipeline_mode<synchronous>, transform_indices = @transform_2, window_bounds = array<i64: 1, 64>}, {pipeline_mode = #tpu.pipeline_mode<synchronous>, transform_indices = @transform_3, window_bounds = array<i64: 64, 128>}, {pipeline_mode = #tpu.pipeline_mode<synchronous>, transform_indices = @transform_4, window_bounds = array<i64: 1, 128>}, {transform_indices = @transform_5, window_bounds = array<i64: 2, 128>}]} {
    %c0_i32 = arith.constant 0 : i32
    %0 = arith.cmpi eq, %arg1, %c0_i32 : i32
    %1 = arith.extui %0 : i1 to i32
    %c0_i32_0 = arith.constant 0 : i32
    %2 = arith.cmpi ne, %1, %c0_i32_0 : i32
    scf.if %2 {
      %cst_12 = arith.constant 0.000000e+00 : f32
      %15 = vector.broadcast %cst_12 : f32 to vector<2x64xf32>
      %c0_13 = arith.constant 0 : index
      %c0_14 = arith.constant 0 : index
      %16 = vector.load %arg8[%c0_13, %c0_14] : memref<2x64xf32, #tpu.memory_space<vmem>>, vector<2x64xf32>
      tpu.vector_store %arg8[%c0_13, %c0_14], %15 {strides = array<i32>} : memref<2x64xf32, #tpu.memory_space<vmem>>, vector<2x64xf32>,
    } else {
    }
    %c0 = arith.constant 0 : index
    %c0_1 = arith.constant 0 : index
    %c0_2 = arith.constant 0 : index
    %3 = vector.load %arg2[%c0, %c0_1, %c0_2] : memref<2x8x64xf32, #tpu.memory_space<vmem>>, vector<2x8x64xf32>
    %cst = arith.constant dense<0.000000e+00> : vector<2x8xf32>
    %4 = vector.multi_reduction <add>, %3, %cst [2] : vector<2x8x64xf32> to vector<2x8xf32>
    %cst_3 = arith.constant 1.562500e-02 : f32
    %5 = vector.broadcast %cst_3 : f32 to vector<2x8xf32>
    %6 = arith.mulf %4, %5 : vector<2x8xf32>
    %c0_4 = arith.constant 0 : index
    %c0_5 = arith.constant 0 : index
    %7 = vector.load %arg8[%c0_4, %c0_5] : memref<2x64xf32, #tpu.memory_space<vmem>>, vector<2x64xf32>
    %c0_6 = arith.constant 0 : index
    %c0_7 = arith.constant 0 : index
    %8 = vector.load %arg3[%c0_6, %c0_7] : memref<8x64xf32, #tpu.memory_space<vmem>>, vector<8x64xf32>
    %cst_8 = arith.constant dense<0.000000e+00> : vector<2x64xf32>
    %9 = tpu.matmul %6, %8, %cst_8 {dimension_numbers = #tpu.dot_dimension_numbers<[1], [0], [0], [1], [0, 0, 1, 1], [], []>} : vector<2x8xf32>, vector<8x64xf32>, vector<2x64xf32> -> vector<2x64xf32>
    %10 = arith.addf %7, %9 : vector<2x64xf32>
    %c0_9 = arith.constant 0 : index
    %c0_10 = arith.constant 0 : index
    %11 = vector.load %arg8[%c0_9, %c0_10] : memref<2x64xf32, #tpu.memory_space<vmem>>, vector<2x64xf32>
    tpu.vector_store %arg8[%c0_9, %c0_10], %10 {strides = array<i32>} : memref<2x64xf32, #tpu.memory_space<vmem>>, vector<2x64xf32>,
    %c3_i32 = arith.constant 3 : i32
    %12 = arith.cmpi eq, %arg1, %c3_i32 : i32
    %13 = arith.extui %12 : i1 to i32
    %c0_i32_11 = arith.constant 0 : i32
    %14 = arith.cmpi ne, %13, %c0_i32_11 : i32
    scf.if %14 {
      %c0_12 = arith.constant 0 : index
      %c0_13 = arith.constant 0 : index
      %15 = vector.load %arg8[%c0_12, %c0_13] : memref<2x64xf32, #tpu.memory_space<vmem>>, vector<2x64xf32>
      %c0_14 = arith.constant 0 : index
      %c0_15 = arith.constant 0 : index
      %16 = vector.load %arg4[%c0_14, %c0_15] : memref<1x64xf32, #tpu.memory_space<vmem>>, vector<1x64xf32>
      %17 = vector.broadcast %16 : vector<1x64xf32> to vector<2x64xf32>
      %18 = arith.addf %15, %17 : vector<2x64xf32>
      %c0_16 = arith.constant 0 : index
      %c0_17 = arith.constant 0 : index
      %19 = vector.load %arg5[%c0_16, %c0_17] : memref<64x128xf32, #tpu.memory_space<vmem>>, vector<64x128xf32>
      %cst_18 = arith.constant dense<0.000000e+00> : vector<2x128xf32>
      %20 = tpu.matmul %18, %19, %cst_18 {dimension_numbers = #tpu.dot_dimension_numbers<[1], [0], [0], [1], [0, 0, 1, 1], [], []>} : vector<2x64xf32>, vector<64x128xf32>, vector<2x128xf32> -> vector<2x128xf32>
      %c0_19 = arith.constant 0 : index
      %c0_20 = arith.constant 0 : index
      %21 = vector.load %arg6[%c0_19, %c0_20] : memref<1x128xf32, #tpu.memory_space<vmem>>, vector<1x128xf32>
      %22 = vector.broadcast %21 : vector<1x128xf32> to vector<2x128xf32>
      %23 = arith.addf %20, %22 : vector<2x128xf32>
      %c0_21 = arith.constant 0 : index
      %c0_22 = arith.constant 0 : index
      %24 = vector.load %arg7[%c0_21, %c0_22] : memref<2x128xf32, #tpu.memory_space<vmem>>, vector<2x128xf32>
      tpu.vector_store %arg7[%c0_21, %c0_22], %23 {strides = array<i32>} : memref<2x128xf32, #tpu.memory_space<vmem>>, vector<2x128xf32>,
    } else {
    }
    return
  }
  func.func @transform_0(%arg0: i32, %arg1: i32) -> (i32, i32, i32) {
    %c0_i32 = arith.constant 0 : i32
    %c0_i32_0 = arith.constant 0 : i32
    return %arg0, %arg1, %c0_i32 : i32, i32, i32
  }
  func.func @transform_1(%arg0: i32, %arg1: i32) -> (i32, i32) {
    %c0_i32 = arith.constant 0 : i32
    %c0_i32_0 = arith.constant 0 : i32
    return %arg1, %c0_i32 : i32, i32
  }
  func.func @transform_2(%arg0: i32, %arg1: i32) -> (i32, i32) {
    %c0_i32 = arith.constant 0 : i32
    %c0_i32_0 = arith.constant 0 : i32
    %c0_i32_1 = arith.constant 0 : i32
    return %c0_i32, %c0_i32_0 : i32, i32
  }
  func.func @transform_3(%arg0: i32, %arg1: i32) -> (i32, i32) {
    %c0_i32 = arith.constant 0 : i32
    %c0_i32_0 = arith.constant 0 : i32
    %c0_i32_1 = arith.constant 0 : i32
    return %c0_i32, %c0_i32_0 : i32, i32
  }
  func.func @transform_4(%arg0: i32, %arg1: i32) -> (i32, i32) {
    %c0_i32 = arith.constant 0 : i32
    %c0_i32_0 = arith.constant 0 : i32
    %c0_i32_1 = arith.constant 0 : i32
    return %c0_i32, %c0_i32_0 : i32, i32
  }
  func.func @transform_5(%arg0: i32, %arg1: i32) -> (i32, i32) {
    %c0_i32 = arith.constant 0 : i32
    %c0_i32_0 = arith.constant 0 : i32
    return %arg0, %c0_i32 : i32, i32
  }
}

</mosaic_0001>

<llo_original>
// kernel: tpu_custom_call.1
$region0: #{tpu_custom_call.1}
  #allocation0 [shape = 'u32[]', space=smem, size = 0x4, offset = 0x4, fixed_abs, tag = 'smem constant byte address 0x4 - core index']
  #allocation1 [shape = 'u32[144,128]{1,0:T(1,128)}', space=vmem, size = 0x12000, scoped, tag = 'internal scratch']
  #allocation2 [shape = 'f32[2,64]{1,0:T(2,128)}', space=vmem, size = 0x400, scoped, tag = 'scratch operand']
  %s0 = inlined_call_operand.hbm [shape: f32[2,32,64], index: 0, kind: input, shape index: {}]
  %s1 = inlined_call_operand.hbm [shape: f32[32,64], index: 1, kind: input, shape index: {}]
  %s2 = inlined_call_operand.hbm [shape: f32[1,64], index: 2, kind: input, shape index: {}]
  %s3 = inlined_call_operand.hbm [shape: f32[64,128], index: 3, kind: input, shape index: {}]
  %s4 = inlined_call_operand.hbm [shape: f32[1,128], index: 4, kind: input, shape index: {}]
  %s5 = inlined_call_operand.hbm [shape: f32[2,128], index: 5, kind: output, shape index: {}]
  %s6 = sld [smem:[#allocation0]]
  $region81: #{tpu_custom_call.1} parent=0
    _
  %s8 = ssub.s32 1, %s6
  %s9 = scalar_select 0, %s8, %s6
  $region1: #{tpu_custom_call.1} parent=0
    #allocation3 [shape = 'u8[16384]{0}', space=vmem, size = 0x4000, scoped, tag = 'input window, operand 0']
    #allocation4 [shape = 's32[2]{0}', space=sflag, size = 0x8, scoped, tag = 'scoped memory for tpu_custom_call.1']
    #allocation5 [shape = 's32[2]{0}', space=sflag, size = 0x8, scoped, tag = 'scoped memory for tpu_custom_call.1']
    #allocation6 [shape = 'u8[8192]{0}', space=vmem, size = 0x2000, scoped, tag = 'input window, operand 1']
    #allocation7 [shape = 's32[2]{0}', space=sflag, size = 0x8, scoped, tag = 'scoped memory for tpu_custom_call.1']
    #allocation8 [shape = 'u8[512]{0}', space=vmem, size = 0x400, scoped, tag = 'input window, operand 2, single buffered']
    #allocation9 [shape = 'u8[32768]{0}', space=vmem, size = 0x8000, scoped, tag = 'input window, operand 3, single buffered']
    #allocation10 [shape = 's32[1]{0}', space=sflag, size = 0x4, scoped, tag = 'scoped memory for tpu_custom_call.1']
    #allocation11 [shape = 'u8[512]{0}', space=vmem, size = 0x400, scoped, tag = 'input window, operand 4, single buffered']
    #allocation12 [shape = 'u8[1024]{0}', space=vmem, size = 0x400, scoped, tag = 'output window, operand 0, single buffered']
    %10 = vsyncpa [#allocation4], 0
    %s11 = scalar_lea.sflag [#allocation4], 1
    %12 = vsyncpa %s11, 0
    %13 = vsyncpa [#allocation7], 0
    %s14 = scalar_lea.sflag [#allocation7], 1
    %15 = vsyncpa %s14, 0
    %16 = vsyncpa [#allocation10], 0
    %17 = vsyncpa [#allocation5], 0
    loop: start=0, step=1, limit=6
    $region2: #{tpu_custom_call.1} parent=1 // loop_pre_header
      _
    $region3: #{tpu_custom_call.1} parent=1 // loop_header
      %s19 = sphi 0, %s23
      %p20 = scmp.ge.s32.totalorder %s19, 6
      %s26 = sphi 0, %s38
      %s27 = sphi 0, %s34
      %s28 = sphi 0, %s26
      %s29 = sphi 0, %s27
      %s30 = sphi 0, %s28
      %s31 = sphi 0, %s29
      %s43 = sphi 0, %s45
      %s46 = sphi 0, %s43
      %s47 = sphi 0, %s46
      %s63 = sphi 0, %s47
      %s69 = sphi 0, %s71
      %s72 = sphi 0, %s69
      %s73 = sphi 0, %s72
      %s89 = sphi 0, %s73
      %s93 = sphi 0, %s93
      %s95 = sphi 0, %s93
      %s96 = sphi 0, %s95
      %s110 = sphi 0, %s96
      %s114 = sphi 0, %s114
      %s116 = sphi 0, %s114
      %s117 = sphi 0, %s116
      %s131 = sphi 0, %s117
      %s135 = sphi 0, %s135
      %s137 = sphi 0, %s135
      %s138 = sphi 0, %s137
      %s152 = sphi 0, %s138
      %s158 = sphi 0, %s160
      %s161 = sphi 0, %s158
      %s162 = sphi 0, %s161
      %s178 = sphi 0, %s162
    $region4: #{tpu_custom_call.1} parent=1 // loop_header_branch
      %22 = sbr.rel (%p20) target = $region8
    $region5: #{tpu_custom_call.1} parent=1 // loop_body
      %s24 = ssub.s32 %s19, 1
      %s25 = ssub.s32 %s19, 2
      %s32 = sadd.s32 1, %s27
      %p33 = scmp.ge.s32.totalorder %s32, 4
      %s34 = scalar_select %p33, 0, %s32
      %s35 = sadd.s32 1, %s26
      %s36 = scalar_select %p33, %s35, %s26
      %p37 = scmp.ge.s32.totalorder %s36, 1
      %s38 = scalar_select %p37, 0, %s36
      %s39 = ssub.s32 %s26, %s38
      %s40 = ssub.s32 %s27, %s34
      %s41 = sor.u32 %s39, %s40
      %p42 = scmp.eq.s32.totalorder %s41, 0
      %s44 = sadd.s32 %s43, 1
      %s45 = scalar_select %p42, %s43, %s44
      %p48 = pneg %p42
      %p49 = scmp.eq.s32.totalorder %s19, 3
      %p50 = por %p48, %p49
      %p51 = scmp.ne.s32.totalorder %s43, %s46
      %p52 = scmp.eq.s32.totalorder %s19, 0
      %p53 = por %p51, %p52
      %p54 = scmp.ne.s32.totalorder %s43, %s46
      %p55 = scmp.eq.s32.totalorder %s24, 3
      %p56 = por %p54, %p55
      %p57 = scmp.ne.s32.totalorder %s46, %s47
      %p58 = scmp.eq.s32.totalorder %s24, 0
      %p59 = por %p57, %p58
      %p60 = scmp.ne.s32.totalorder %s46, %s47
      %p61 = scmp.eq.s32.totalorder %s25, 3
      %p62 = por %p60, %p61
      %p64 = scmp.ne.s32.totalorder %s47, %s63
      %p65 = scmp.eq.s32.totalorder %s25, 0
      %p66 = por %p64, %p65
      %s67 = ssub.s32 %s27, %s34
      %p68 = scmp.eq.s32.totalorder %s67, 0
      %s70 = sadd.s32 %s69, 1
      %s71 = scalar_select %p68, %s69, %s70
      %p74 = pneg %p68
      %p75 = scmp.eq.s32.totalorder %s19, 3
      %p76 = por %p74, %p75
      %p77 = scmp.ne.s32.totalorder %s69, %s72
      %p78 = scmp.eq.s32.totalorder %s19, 0
      %p79 = por %p77, %p78
      %p80 = scmp.ne.s32.totalorder %s69, %s72
      %p81 = scmp.eq.s32.totalorder %s24, 3
      %p82 = por %p80, %p81
      %p83 = scmp.ne.s32.totalorder %s72, %s73
      %p84 = scmp.eq.s32.totalorder %s24, 0
      %p85 = por %p83, %p84
      %p86 = scmp.ne.s32.totalorder %s72, %s73
      %p87 = scmp.eq.s32.totalorder %s25, 3
      %p88 = por %p86, %p87
      %p90 = scmp.ne.s32.totalorder %s73, %s89
      %p91 = scmp.eq.s32.totalorder %s25, 0
      %p92 = por %p90, %p91
      %s94 = sadd.s32 %s93, 1
      %p97 = scmp.eq.s32.totalorder %s19, 3
      %p98 = scmp.ne.s32.totalorder %s93, %s95
      %p99 = scmp.eq.s32.totalorder %s19, 0
      %p100 = por %p98, %p99
      %p101 = scmp.ne.s32.totalorder %s93, %s95
      %p102 = scmp.eq.s32.totalorder %s24, 3
      %p103 = por %p101, %p102
      %p104 = scmp.ne.s32.totalorder %s95, %s96
      %p105 = scmp.eq.s32.totalorder %s24, 0
      %p106 = por %p104, %p105
      %p107 = scmp.ne.s32.totalorder %s95, %s96
      %p108 = scmp.eq.s32.totalorder %s25, 3
      %p109 = por %p107, %p108
      %p111 = scmp.ne.s32.totalorder %s96, %s110
      %p112 = scmp.eq.s32.totalorder %s25, 0
      %p113 = por %p111, %p112
      %s115 = sadd.s32 %s114, 1
      %p118 = scmp.eq.s32.totalorder %s19, 3
      %p119 = scmp.ne.s32.totalorder %s114, %s116
      %p120 = scmp.eq.s32.totalorder %s19, 0
      %p121 = por %p119, %p120
      %p122 = scmp.ne.s32.totalorder %s114, %s116
      %p123 = scmp.eq.s32.totalorder %s24, 3
      %p124 = por %p122, %p123
      %p125 = scmp.ne.s32.totalorder %s116, %s117
      %p126 = scmp.eq.s32.totalorder %s24, 0
      %p127 = por %p125, %p126
      %p128 = scmp.ne.s32.totalorder %s116, %s117
      %p129 = scmp.eq.s32.totalorder %s25, 3
      %p130 = por %p128, %p129
      %p132 = scmp.ne.s32.totalorder %s117, %s131
      %p133 = scmp.eq.s32.totalorder %s25, 0
      %p134 = por %p132, %p133
      %s136 = sadd.s32 %s135, 1
      %p139 = scmp.eq.s32.totalorder %s19, 3
      %p140 = scmp.ne.s32.totalorder %s135, %s137
      %p141 = scmp.eq.s32.totalorder %s19, 0
      %p142 = por %p140, %p141
      %p143 = scmp.ne.s32.totalorder %s135, %s137
      %p144 = scmp.eq.s32.totalorder %s24, 3
      %p145 = por %p143, %p144
      %p146 = scmp.ne.s32.totalorder %s137, %s138
      %p147 = scmp.eq.s32.totalorder %s24, 0
      %p148 = por %p146, %p147
      %p149 = scmp.ne.s32.totalorder %s137, %s138
      %p150 = scmp.eq.s32.totalorder %s25, 3
      %p151 = por %p149, %p150
      %p153 = scmp.ne.s32.totalorder %s138, %s152
      %p154 = scmp.eq.s32.totalorder %s25, 0
      %p155 = por %p153, %p154
      %s156 = ssub.s32 %s26, %s38
      %p157 = scmp.eq.s32.totalorder %s156, 0
      %s159 = sadd.s32 %s158, 1
      %s160 = scalar_select %p157, %s158, %s159
      %p163 = pneg %p157
      %p164 = scmp.eq.s32.totalorder %s19, 3
      %p165 = por %p163, %p164
      %p166 = scmp.ne.s32.totalorder %s158, %s161
      %p167 = scmp.eq.s32.totalorder %s19, 0
      %p168 = por %p166, %p167
      %p169 = scmp.ne.s32.totalorder %s158, %s161
      %p170 = scmp.eq.s32.totalorder %s24, 3
      %p171 = por %p169, %p170
      %p172 = scmp.ne.s32.totalorder %s161, %s162
      %p173 = scmp.eq.s32.totalorder %s24, 0
      %p174 = por %p172, %p173
      %p175 = scmp.ne.s32.totalorder %s161, %s162
      %p176 = scmp.eq.s32.totalorder %s25, 3
      %p177 = por %p175, %p176
      %p179 = scmp.ne.s32.totalorder %s162, %s178
      %p180 = scmp.eq.s32.totalorder %s25, 0
      %p181 = por %p179, %p180
      %p182 = scmp.le.s32.totalorder 1, %s19
      %p183 = scmp.lt.s32.totalorder %s19, 5
      %p184 = pnand %p182, %p183
      %p185 = pneg %p184
      // Predicated region
      $region9: #{tpu_custom_call.1} parent=5 // pred_check
        _
      $region10: #{tpu_custom_call.1} parent=5 // pred_check_branch
        %187 = sbr.rel (%p184) target = $region12
      $region11: #{tpu_custom_call.1} parent=5 // pred_region
        %s188 = ssub.s32 %s19, 1
        // Predicated region
        $region13: #{tpu_custom_call.1} parent=11 // pred_check
          %p189 = pneg %p106
        $region14: #{tpu_custom_call.1} parent=11 // pred_check_branch
          %191 = sbr.rel (%p189) target = $region16
        $region15: #{tpu_custom_call.1} parent=11 // pred_region
          %s193 = ssub.s32 16, 16
          %194 = vsyncadd [#allocation7], %s193
          %s196 = sshll.u32 [#allocation8], 4
          %s197 = int_to_ptr.vmem [resolvable:$true] %s196
          %199 = dma.hbm_to_vmem [thread:$0]  %s2, 16, %s197, [#allocation7]
        $region16: #{tpu_custom_call.1} parent=11 // pred_fallthru
          _
        // Predicated region
        $region17: #{tpu_custom_call.1} parent=11 // pred_check
          %p200 = pneg %p127
        $region18: #{tpu_custom_call.1} parent=11 // pred_check_branch
          %202 = sbr.rel (%p200) target = $region20
        $region19: #{tpu_custom_call.1} parent=11 // pred_region
          %s204 = ssub.s32 1024, 1024
          %205 = vsyncadd [#allocation10], %s204
          %s206 = sshll.u32 [#allocation9], 4
          %s207 = int_to_ptr.vmem [resolvable:$true] %s206
          %212 = dma.hbm_to_vmem [thread:$0]  %s3, 1024, %s207, [#allocation10], 128, 128, 8
        $region20: #{tpu_custom_call.1} parent=11 // pred_fallthru
          _
        // Predicated region
        $region21: #{tpu_custom_call.1} parent=11 // pred_check
          %p213 = pneg %p148
        $region22: #{tpu_custom_call.1} parent=11 // pred_check_branch
          %215 = sbr.rel (%p213) target = $region24
        $region23: #{tpu_custom_call.1} parent=11 // pred_region
          %s217 = ssub.s32 16, 16
          %218 = vsyncadd [#allocation10], %s217
          %s220 = sshll.u32 [#allocation11], 4
          %s221 = int_to_ptr.vmem [resolvable:$true] %s220
          %223 = dma.hbm_to_vmem [thread:$0]  %s4, 16, %s221, [#allocation10]
        $region24: #{tpu_custom_call.1} parent=11 // pred_fallthru
          _
      $region12: #{tpu_custom_call.1} parent=5 // pred_fallthru
        _
      %p224 = scmp.lt.s32.totalorder %s19, 4
      // Predicated region
      $region25: #{tpu_custom_call.1} parent=5 // pred_check
        %p225 = pneg %p224
      $region26: #{tpu_custom_call.1} parent=5 // pred_check_branch
        %227 = sbr.rel (%p225) target = $region28
      $region27: #{tpu_custom_call.1} parent=5 // pred_region
        // Predicated region
        $region29: #{tpu_custom_call.1} parent=27 // pred_check
          %p228 = pneg %p53
        $region30: #{tpu_custom_call.1} parent=27 // pred_check_branch
          %230 = sbr.rel (%p228) target = $region32
        $region31: #{tpu_custom_call.1} parent=27 // pred_region
          %s231 = sand.u32 %s43, 1
          %s232 = scalar_lea.sflag [#allocation4], %s231
          %s233 = sand.u32 %s43, 1
          %s234 = smul.addr %s233, 16
          %s235 = scalar_lea.vmem [#allocation3], %s234
          %s236 = smul.u32 2, %s26
          %s238 = ssub.s32 256, 256
          %239 = vsyncadd %s232, %s238
          %s240 = smul.addr %s236, 4
          %s241 = sadd.s32 %s27, %s240
          %s242 = smul.addr %s241, 128
          %s243 = scalar_lea.hbm %s0, %s242
          %s244 = sshll.u32 %s235, 4
          %s245 = int_to_ptr.vmem [resolvable:$true] %s244
          %250 = dma.hbm_to_vmem [thread:$0]  %s243, 256, %s245, %s232, 512, 128, 8
        $region32: #{tpu_custom_call.1} parent=27 // pred_fallthru
          _
        // Predicated region
        $region33: #{tpu_custom_call.1} parent=27 // pred_check
          %p251 = pneg %p79
        $region34: #{tpu_custom_call.1} parent=27 // pred_check_branch
          %253 = sbr.rel (%p251) target = $region36
        $region35: #{tpu_custom_call.1} parent=27 // pred_region
          %s254 = sand.u32 %s19, 1
          %s255 = scalar_lea.sflag [#allocation7], %s254
          %s256 = sand.u32 %s69, 1
          %s257 = smul.addr %s256, 8
          %s258 = scalar_lea.vmem [#allocation6], %s257
          %s260 = ssub.s32 128, 128
          %261 = vsyncadd %s255, %s260
          %s262 = smul.addr %s27, 128
          %s263 = scalar_lea.hbm %s1, %s262
          %s265 = sshll.u32 %s258, 4
          %s266 = int_to_ptr.vmem [resolvable:$true] %s265
          %268 = dma.hbm_to_vmem [thread:$0]  %s263, 128, %s266, %s255
        $region36: #{tpu_custom_call.1} parent=27 // pred_fallthru
          _
      $region28: #{tpu_custom_call.1} parent=5 // pred_fallthru
        _
      %p269 = scmp.le.s32.totalorder 1, %s19
      %p270 = scmp.lt.s32.totalorder %s19, 5
      %p271 = pnand %p269, %p270
      %p272 = pneg %p271
      // Predicated region
      $region37: #{tpu_custom_call.1} parent=5 // pred_check
        _
      $region38: #{tpu_custom_call.1} parent=5 // pred_check_branch
        %274 = sbr.rel (%p271) target = $region40
      $region39: #{tpu_custom_call.1} parent=5 // pred_region
        %s275 = ssub.s32 %s19, 1
        %s276 = sand.u32 %s46, 1
        %s277 = scalar_lea.sflag [#allocation4], %s276
        %s278 = sand.u32 %s46, 1
        %s279 = smul.addr %s278, 16
        %s280 = scalar_lea.vmem [#allocation3], %s279
        // Predicated region
        $region41: #{tpu_custom_call.1} parent=39 // pred_check
          %p281 = pneg %p59
        $region42: #{tpu_custom_call.1} parent=39 // pred_check_branch
          %283 = sbr.rel (%p281) target = $region44
        $region43: #{tpu_custom_call.1} parent=39 // pred_region
          %284 = dma.done %s277, 256
        $region44: #{tpu_custom_call.1} parent=39 // pred_fallthru
          _
        %s285 = sand.u32 %s24, 1
        %s286 = scalar_lea.sflag [#allocation7], %s285
        %s287 = sand.u32 %s72, 1
        %s288 = smul.addr %s287, 8
        %s289 = scalar_lea.vmem [#allocation6], %s288
        // Predicated region
        $region45: #{tpu_custom_call.1} parent=39 // pred_check
          %p290 = pneg %p85
        $region46: #{tpu_custom_call.1} parent=39 // pred_check_branch
          %292 = sbr.rel (%p290) target = $region48
        $region47: #{tpu_custom_call.1} parent=39 // pred_region
          %293 = dma.done %s286, 128
        $region48: #{tpu_custom_call.1} parent=39 // pred_fallthru
          _
        // Predicated region
        $region49: #{tpu_custom_call.1} parent=39 // pred_check
          %p294 = pneg %p106
        $region50: #{tpu_custom_call.1} parent=39 // pred_check_branch
          %296 = sbr.rel (%p294) target = $region52
        $region51: #{tpu_custom_call.1} parent=39 // pred_region
          %297 = dma.done [#allocation7], 16
        $region52: #{tpu_custom_call.1} parent=39 // pred_fallthru
          _
        // Predicated region
        $region53: #{tpu_custom_call.1} parent=39 // pred_check
          %p298 = pneg %p127
        $region54: #{tpu_custom_call.1} parent=39 // pred_check_branch
          %300 = sbr.rel (%p298) target = $region56
        $region55: #{tpu_custom_call.1} parent=39 // pred_region
          %301 = dma.done [#allocation10], 1024
        $region56: #{tpu_custom_call.1} parent=39 // pred_fallthru
          _
        // Predicated region
        $region57: #{tpu_custom_call.1} parent=39 // pred_check
          %p302 = pneg %p148
        $region58: #{tpu_custom_call.1} parent=39 // pred_check_branch
          %304 = sbr.rel (%p302) target = $region60
        $region59: #{tpu_custom_call.1} parent=39 // pred_region
          %305 = dma.done [#allocation10], 16
        $region60: #{tpu_custom_call.1} parent=39 // pred_fallthru
          _
        %s306 = sand.u32 %s46, 1
        %s307 = scalar_lea.sflag [#allocation4], %s306
        %s308 = sand.u32 %s46, 1
        %s309 = smul.addr %s308, 16
        %s310 = scalar_lea.vmem [#allocation3], %s309
        %p311 = pneg %p59
        %p312 = pneg %p56
        %s313 = sand.u32 %s24, 1
        %s314 = scalar_lea.sflag [#allocation7], %s313
        %s315 = sand.u32 %s72, 1
        %s316 = smul.addr %s315, 8
        %s317 = scalar_lea.vmem [#allocation6], %s316
        %p318 = pneg %p85
        %p319 = pneg %p82
        %p320 = pneg %p106
        %p321 = pneg %p103
        %p322 = pneg %p127
        %p323 = pneg %p124
        %p324 = pneg %p148
        %p325 = pneg %p145
        %p326 = pneg %p174
        %p327 = pneg %p171
        %s328 = smul.u32 2, %s28
        %p329 = scmp.eq.s32.totalorder %s29, 0
        // Predicated region
        $region61: #{tpu_custom_call.1} parent=39 // pred_check
          %p330 = pneg %p329
        $region62: #{tpu_custom_call.1} parent=39 // pred_check_branch
          %332 = sbr.rel (%p330) target = $region64
        $region63: #{tpu_custom_call.1} parent=39 // pred_region
          %vm333 = vcmask 517120
          %334 = vst.msk [vmem:[#allocation2] sm:$0x3] %vm333, 0.0
        $region64: #{tpu_custom_call.1} parent=39 // pred_fallthru
          _
        %v335 = vld [vmem:[%s280] sm:$0xff]
        %v336 = vld [vmem:[%s280 + $0x8] sm:$0xff]
        %vm337 = vcmask 523264
        %v338 = vsel %vm337, %v335, 0.0
        %339 = vadd.xlane.f32.xlu0 %v338
        %v340 = vpop.xlane.xlu0 %339
        %v341 = vsel %vm337, %v336, 0.0
        %342 = vadd.xlane.f32.xlu0 %v341
        %v343 = vpop.xlane.xlu0 %342
        %v344 = vmul.f32 %v340, 0.015625
        %v345 = vmul.f32 %v343, 0.015625
        %v346 = vld [vmem:[#allocation2] sm:$0x3]
        %v347 = vld [vmem:[%s289] sm:$0xff]
        %v350 = vlaneseq
        %v351 = vand.u32 %v350, 127
        %v352 = vlaneseq
        %v353 = vshrl.u32 %v352, 7
        %v354 = vsub.s32 %v351, %v353
        %v355 = vrot.slane %v344, %v354
        %v356 = vlaneseq
        %v357 = vshrl.u32 %v356, 7
        %v358 = vsub.s32 %v351, %v357
        %v359 = vrot.slane %v345, %v358
        %vm360 = vcmask 1041409
        %v361 = vsel %vm360, %v359, %v355
        %vm362 = vcmask 64512
        %v363 = vsel %vm362, %v361, 0
        %365 = vmatprep.subr.mxu0 0.0
        %366 = vmatpush1.msra.mxu0 %v347
        %367 = vmatprep.subr.mxu0 0.0
        %368 = vmatpush1.msra.mxu0 0.0
        %369 = vmatprep.subr.mxu0 0.0
        %370 = vmatpush1.msra.mxu0 0.0
        %371 = vmatprep.subr.mxu0 0.0
        %372 = vmatpush1.msra.mxu0 0.0
        %373 = vmatprep.subr.mxu0 0.0
        %374 = vmatpush1.msra.mxu0 0.0
        %375 = vmatprep.subr.mxu0 0.0
        %376 = vmatpush1.msra.mxu0 0.0
        %377 = vmatprep.subr.mxu0 0.0
        %378 = vmatpush1.msra.mxu0 0.0
        %379 = vmatprep.subr.mxu0 0.0
        %380 = vmatpush1.msra.mxu0 0.0
        %381 = vmatprep.subr.mxu0 0.0
        %382 = vmatpush1.msra.mxu0 0.0
        %383 = vmatprep.subr.mxu0 0.0
        %384 = vmatpush1.msra.mxu0 0.0
        %385 = vmatprep.subr.mxu0 0.0
        %386 = vmatpush1.msra.mxu0 0.0
        %387 = vmatprep.subr.mxu0 0.0
        %388 = vmatpush1.msra.mxu0 0.0
        %389 = vmatprep.subr.mxu0 0.0
        %390 = vmatpush1.msra.mxu0 0.0
        %391 = vmatprep.subr.mxu0 0.0
        %392 = vmatpush1.msra.mxu0 0.0
        %393 = vmatprep.subr.mxu0 0.0
        %394 = vmatpush1.msra.mxu0 0.0
        %395 = vmatprep.subr.mxu0 0.0
        %396 = vmatpush1.msra.mxu0 0.0
        %397 = vmatprep.subr.mxu0 0.0
        %398 = vmatpush1.msra.mxu0 0.0
        %399 = vmatprep.subr.mxu0 0.0
        %400 = vmatpush1.msra.mxu0 0.0
        %401 = vmatprep.subr.mxu0 0.0
        %402 = vmatpush1.msra.mxu0 0.0
        %403 = vmatprep.subr.mxu0 0.0
        %404 = vmatpush1.msra.mxu0 0.0
        %405 = vmatprep.subr.mxu0 0.0
        %406 = vmatpush1.msra.mxu0 0.0
        %407 = vmatprep.subr.mxu0 0.0
        %408 = vmatpush1.msra.mxu0 0.0
        %409 = vmatprep.subr.mxu0 0.0
        %410 = vmatpush1.msra.mxu0 0.0
        %411 = vmatprep.subr.mxu0 0.0
        %412 = vmatpush1.msra.mxu0 0.0
        %413 = vmatprep.subr.mxu0 0.0
        %414 = vmatpush1.msra.mxu0 0.0
        %415 = vmatprep.subr.mxu0 0.0
        %416 = vmatpush1.msra.mxu0 0.0
        %417 = vmatprep.subr.mxu0 0.0
        %418 = vmatpush1.msra.mxu0 0.0
        %419 = vmatprep.subr.mxu0 0.0
        %420 = vmatpush1.msra.mxu0 0.0
        %421 = vmatprep.subr.mxu0 0.0
        %422 = vmatpush1.msra.mxu0 0.0
        %423 = vmatprep.subr.mxu0 0.0
        %424 = vmatpush1.msra.mxu0 0.0
        %425 = vmatprep.subr.mxu0 0.0
        %426 = vmatpush1.msra.mxu0 0.0
        %427 = vmatprep.subr.mxu0 0.0
        %428 = vmatpush1.msra.mxu0 0.0
        %429 = vmatprep.mubr.f32.mxu0 0.0
        %430 = vmatmul.mubr.f32.gmra.mrb[0].mxu0 %v363
        %v431 = vpop.f32.mrb[0].mxu0
        %v432 = vadd.f32 0.0, %v431
        %v433 = vpop.f32.mrb[0].mxu0
        %434 = vdwg.mxu0
        %v435 = vadd.f32 %v346, %v432
        %vm436 = vcmask 517120
        %437 = vst.msk [vmem:[#allocation2] sm:$0x3] %vm436, %v435
        %p438 = scmp.eq.s32.totalorder %s29, 3
        // Predicated region
        $region65: #{tpu_custom_call.1} parent=39 // pred_check
          %p439 = pneg %p438
        $region66: #{tpu_custom_call.1} parent=39 // pred_check_branch
          %441 = sbr.rel (%p439) target = $region68
        $region67: #{tpu_custom_call.1} parent=39 // pred_region
          %v442 = vld [vmem:[#allocation2] sm:$0x3]
          %v443 = vld [vmem:[#allocation8] sm:$0x1]
          %v445 = vlaneseq
          %v446 = vshrl.u32 %v445, 7
          %v447 = vsub.s32 0, %v446
          %v448 = vrot.slane %v443, %v447
          %v450 = vadd.f32 %v442, %v448
          %v451 = vld [vmem:[#allocation9] sm:$0xff]
          %v452 = vld [vmem:[#allocation9 + $0x8] sm:$0xff]
          %v453 = vld [vmem:[#allocation9 + $0x10] sm:$0xff]
          %v454 = vld [vmem:[#allocation9 + $0x18] sm:$0xff]
          %v455 = vld [vmem:[#allocation9 + $0x20] sm:$0xff]
          %v456 = vld [vmem:[#allocation9 + $0x28] sm:$0xff]
          %v457 = vld [vmem:[#allocation9 + $0x30] sm:$0xff]
          %v458 = vld [vmem:[#allocation9 + $0x38] sm:$0xff]
          %v459 = vld [vmem:[#allocation11] sm:$0x1]
          %v461 = vlaneseq
          %v462 = vshrl.u32 %v461, 7
          %v463 = vsub.s32 0, %v462
          %v464 = vrot.slane %v459, %v463
          %v467 = vsel %vm337, %v450, 0
          %469 = vmatprep.subr.mxu0 0.0
          %470 = vmatpush1.msra.mxu0 %v451
          %471 = vmatprep.subr.mxu0 0.0
          %472 = vmatpush1.msra.mxu0 %v452
          %473 = vmatprep.subr.mxu0 0.0
          %474 = vmatpush1.msra.mxu0 %v453
          %475 = vmatprep.subr.mxu0 0.0
          %476 = vmatpush1.msra.mxu0 %v454
          %477 = vmatprep.subr.mxu0 0.0
          %478 = vmatpush1.msra.mxu0 %v455
          %479 = vmatprep.subr.mxu0 0.0
          %480 = vmatpush1.msra.mxu0 %v456
          %481 = vmatprep.subr.mxu0 0.0
          %482 = vmatpush1.msra.mxu0 %v457
          %483 = vmatprep.subr.mxu0 0.0
          %484 = vmatpush1.msra.mxu0 %v458
          %485 = vmatprep.subr.mxu0 0.0
          %486 = vmatpush1.msra.mxu0 0.0
          %487 = vmatprep.subr.mxu0 0.0
          %488 = vmatpush1.msra.mxu0 0.0
          %489 = vmatprep.subr.mxu0 0.0
          %490 = vmatpush1.msra.mxu0 0.0
          %491 = vmatprep.subr.mxu0 0.0
          %492 = vmatpush1.msra.mxu0 0.0
          %493 = vmatprep.subr.mxu0 0.0
          %494 = vmatpush1.msra.mxu0 0.0
          %495 = vmatprep.subr.mxu0 0.0
          %496 = vmatpush1.msra.mxu0 0.0
          %497 = vmatprep.subr.mxu0 0.0
          %498 = vmatpush1.msra.mxu0 0.0
          %499 = vmatprep.subr.mxu0 0.0
          %500 = vmatpush1.msra.mxu0 0.0
          %501 = vmatprep.subr.mxu0 0.0
          %502 = vmatpush1.msra.mxu0 0.0
          %503 = vmatprep.subr.mxu0 0.0
          %504 = vmatpush1.msra.mxu0 0.0
          %505 = vmatprep.subr.mxu0 0.0
          %506 = vmatpush1.msra.mxu0 0.0
          %507 = vmatprep.subr.mxu0 0.0
          %508 = vmatpush1.msra.mxu0 0.0
          %509 = vmatprep.subr.mxu0 0.0
          %510 = vmatpush1.msra.mxu0 0.0
          %511 = vmatprep.subr.mxu0 0.0
          %512 = vmatpush1.msra.mxu0 0.0
          %513 = vmatprep.subr.mxu0 0.0
          %514 = vmatpush1.msra.mxu0 0.0
          %515 = vmatprep.subr.mxu0 0.0
          %516 = vmatpush1.msra.mxu0 0.0
          %517 = vmatprep.subr.mxu0 0.0
          %518 = vmatpush1.msra.mxu0 0.0
          %519 = vmatprep.subr.mxu0 0.0
          %520 = vmatpush1.msra.mxu0 0.0
          %521 = vmatprep.subr.mxu0 0.0
          %522 = vmatpush1.msra.mxu0 0.0
          %523 = vmatprep.subr.mxu0 0.0
          %524 = vmatpush1.msra.mxu0 0.0
          %525 = vmatprep.subr.mxu0 0.0
          %526 = vmatpush1.msra.mxu0 0.0
          %527 = vmatprep.subr.mxu0 0.0
          %528 = vmatpush1.msra.mxu0 0.0
          %529 = vmatprep.subr.mxu0 0.0
          %530 = vmatpush1.msra.mxu0 0.0
          %531 = vmatprep.subr.mxu0 0.0
          %532 = vmatpush1.msra.mxu0 0.0
          %533 = vmatprep.mubr.f32.mxu0 0.0
          %534 = vmatmul.mubr.f32.gmra.mrb[0].mxu0 %v467
          %v535 = vpop.f32.mrb[0].mxu0
          %v536 = vadd.f32 %v464, %v535
          %v537 = vpop.f32.mrb[0].mxu0
          %538 = vdwg.mxu0
          %539 = vst [vmem:[#allocation12] sm:$0x3] %v536
        $region68: #{tpu_custom_call.1} parent=39 // pred_fallthru
          _
        // Predicated region
        $region69: #{tpu_custom_call.1} parent=39 // pred_check
          %p540 = pneg %p171
        $region70: #{tpu_custom_call.1} parent=39 // pred_check_branch
          %542 = sbr.rel (%p540) target = $region72
        $region71: #{tpu_custom_call.1} parent=39 // pred_region
          %s544 = ssub.s32 32, 32
          %545 = vsyncadd [#allocation5], %s544
          %s546 = smul.addr %s28, 32
          %s547 = scalar_lea.hbm %s5, %s546
          %s549 = sshll.u32 [#allocation12], 4
          %s550 = int_to_ptr.vmem [resolvable:$true] %s549
          %552 = dma.vmem_to_hbm [thread:$0]  %s550, 32, %s547, [#allocation5]
        $region72: #{tpu_custom_call.1} parent=39 // pred_fallthru
          _
        // Predicated region
        $region73: #{tpu_custom_call.1} parent=39 // pred_check
          %p553 = pneg %p171
        $region74: #{tpu_custom_call.1} parent=39 // pred_check_branch
          %555 = sbr.rel (%p553) target = $region76
        $region75: #{tpu_custom_call.1} parent=39 // pred_region
          %556 = dma.done [#allocation5], 32
        $region76: #{tpu_custom_call.1} parent=39 // pred_fallthru
          _
      $region40: #{tpu_custom_call.1} parent=5 // pred_fallthru
        _
      %p557 = scmp.le.s32.totalorder 2, %s19
      // Predicated region
      $region77: #{tpu_custom_call.1} parent=5 // pred_check
        %p558 = pneg %p557
      $region78: #{tpu_custom_call.1} parent=5 // pred_check_branch
        %560 = sbr.rel (%p558) target = $region80
      $region79: #{tpu_custom_call.1} parent=5 // pred_region
        %s561 = ssub.s32 %s19, 2
      $region80: #{tpu_custom_call.1} parent=5 // pred_fallthru
        _
    $region6: #{tpu_custom_call.1} parent=1 // loop_footer
      %s23 = sadd.s32 1, %s19
    $region7: #{tpu_custom_call.1} parent=1 // loop_footer_branch
      %18 = sbr.rel target = $region3
    $region8: #{tpu_custom_call.1} parent=1 // loop_exit
      _
    %562 = vsyncpa [#allocation4], 1
    %s563 = scalar_lea.sflag [#allocation4], 1
    %564 = vsyncpa %s563, 1
    %565 = vsyncpa [#allocation7], 1
    %s566 = scalar_lea.sflag [#allocation7], 1
    %567 = vsyncpa %s566, 1
    %568 = vsyncpa [#allocation10], 1
    %569 = vsyncpa [#allocation5], 1
    %s570 = scalar_lea.sflag [#allocation5], 1
    %571 = vsyncpa %s570, 1

</llo_original>
